<compile_context>
chip_gen: v7x
topology: tpu7x:2x2x1
jax: 0.10.0
libtpu: 0.0.40
codegen_flags: <defaults>
</compile_context>

<pallas_src>
import jax
import jax.numpy as jnp
from jax.experimental import pallas as pl
from jax.experimental.pallas import tpu as pltpu


_BLOCK_BUDGET_BYTES = 4 * 1024 * 1024    # per-block cap: v7x-safe (64 MiB VMEM/TC)
_VMEM_LIMIT_BYTES = 32 * 1024 * 1024     # scoped VMEM limit (also overrides v5e's 16 MiB default)
_TINY_BYTES = 2 * 1024 * 1024            # below this, a single block is fine


def _locked_dropout_kernel(x_ref, m_ref, o_ref):
    """x_ref/o_ref: (seq_tile, F_tile) tiles; m_ref: (8, F_tile) f32 mask of {0, 1/(1-p)}.

    All 8 mask rows are identical; multiplying the (T//8, 8, F)-reshaped x tile
    against the native-layout (8, F) mask avoids re-emitting a sublane
    broadcast every grid step.
    """
    t, f = x_ref.shape
    x = x_ref[...].astype(jnp.float32)
    if t % 8 == 0:
        y = (x.reshape(t // 8, 8, f) * m_ref[...]).reshape(t, f)
    else:
        # Tiny-seq fallback (whole seq in one block, seq_len not a multiple of 8).
        y = x * m_ref[0:1, :]
    o_ref[...] = y.astype(o_ref.dtype)


def _dropout_mask(key, n_features, p, n_padded):
    """(8, n_padded) f32 mask: 1/(1-p) for kept units, 0 for dropped (and for pad)."""
    keep_prob = 1.0 - p
    keep = jax.random.bernoulli(key, p=keep_prob, shape=(1, n_features))
    m = jnp.where(keep, jnp.float32(1.0 / keep_prob), jnp.float32(0.0))
    if n_padded > n_features:
        m = jnp.pad(m, ((0, 0), (0, n_padded - n_features)))
    # 8 identical rows -> native (8, 128) sublane layout for the VMEM-resident block.
    return jnp.broadcast_to(m, (8, n_padded))


def _pick_tiles(seq_len, n_feat, itemsize, block_budget_bytes):
    """Pick (seq_tile, feat_tile).

    Goals (perf review):
      * each block <= block_budget_bytes (<= 4 MiB keeps the double-buffered
        live footprint well inside v7x's 64 MiB VMEM)
      * seq_tile is a multiple of the dtype's sublane-packing factor
        (8 f32 / 16 bf16 / 32 int8)
      * non-trivial inputs get >= 4 grid steps with an EVEN count (software
        pipelining + even split across v7x's 2 TensorCores); tiny inputs stay
        single-block because the ~0.35 us per-step overhead would dominate.
    """
    sub = max(8, 32 // max(itemsize, 1))

    # Feature tile: whole (padded) feature axis if an `sub`-row slab fits the
    # budget, else the largest lane-aligned (multiple-of-128) width that does.
    if n_feat * itemsize * sub <= block_budget_bytes:
        feat_tile = n_feat
    else:
        feat_tile = max(128, (block_budget_bytes // (sub * itemsize)) // 128 * 128)
        feat_tile = min(feat_tile, n_feat)
    feat_steps = -(-n_feat // feat_tile)

    row_bytes = feat_tile * itemsize
    cap_rows = max(sub, (block_budget_bytes // max(row_bytes, 1)) // sub * sub)

    total_bytes = seq_len * n_feat * itemsize
    if total_bytes <= _TINY_BYTES or seq_len <= sub:
        return min(seq_len, cap_rows), feat_tile

    def seq_steps(t):
        return -(-seq_len // t)

    start = min(cap_rows, max(sub, (seq_len // sub) * sub))
    candidates = range(start, sub - 1, -sub)
    tiers = (
        lambda s: s >= 4 and s % 2 == 0,   # pipelined and evenly split on v7x
        lambda s: s >= 2 and s % 2 == 0,   # at least even
        lambda s: s >= 2,                  # at least pipelined
    )
    for good in tiers:
        for t in candidates:
            if good(feat_steps * seq_steps(t)):
                return t, feat_tile
    return start, feat_tile


def locked_dropout(x, *, p=0.5, key=None, training=True, donate_x=False):
    """Pallas LockedDropout forward. x: (seq_len, batch, hidden)."""
    if not training or p == 0.0:
        return x
    if not (0.0 <= p < 1.0):
        raise ValueError(f"dropout p must be in [0, 1), got {p}")
    if key is None:
        raise ValueError("locked_dropout requires an explicit PRNG key when training with p > 0")

    seq_len, batch, hidden = x.shape
    n_feat = batch * hidden
    pad = (-n_feat) % 128                     # keep the lane dim a multiple of 128
    n_feat_p = n_feat + pad
    itemsize = jnp.dtype(x.dtype).itemsize

    x2d = x.reshape(seq_len, n_feat)          # lane-dense 2D layout
    if pad:
        x2d = jnp.pad(x2d, ((0, 0), (0, pad)))

    mask = _dropout_mask(key, n_feat, float(p), n_feat_p)

    seq_tile, feat_tile = _pick_tiles(seq_len, n_feat_p, itemsize, _BLOCK_BUDGET_BYTES)
    grid = (pl.cdiv(n_feat_p, feat_tile), pl.cdiv(seq_len, seq_tile))  # seq innermost

    cost = pl.CostEstimate(
        flops=seq_len * n_feat_p,             # one multiply per element
        transcendentals=0,
        bytes_accessed=2 * seq_len * n_feat_p * itemsize + mask.size * 4,
    )

    out2d = pl.pallas_call(
        _locked_dropout_kernel,
        out_shape=jax.ShapeDtypeStruct((seq_len, n_feat_p), x.dtype),
        grid=grid,
        in_specs=[
            pl.BlockSpec((seq_tile, feat_tile), lambda j, i: (i, j)),
            # Constant block index along the (inner) seq axis -> VMEM-resident mask.
            pl.BlockSpec((8, feat_tile), lambda j, i: (0, j)),
        ],
        out_specs=pl.BlockSpec((seq_tile, feat_tile), lambda j, i: (i, j)),
        compiler_params=pltpu.CompilerParams(
            dimension_semantics=("parallel", "parallel"),
            vmem_limit_bytes=_VMEM_LIMIT_BYTES,
        ),
        cost_estimate=cost,
        input_output_aliases=({0: 0} if donate_x else {}),
    )(x2d, mask)

    if pad:
        out2d = out2d[:, :n_feat]
    return out2d.reshape(seq_len, batch, hidden)


if __name__ == "__main__":
    key = jax.random.PRNGKey(0)
    x_key, mask_key, x2_key, mask2_key = jax.random.split(key, 4)

    # --- primary demo: small shape from the module docstring ---
    seq_len, batch, hidden = 8, 2, 32
    p = 0.5
    x = jax.random.uniform(x_key, (seq_len, batch, hidden), dtype=jnp.float32)

    out = jax.block_until_ready(locked_dropout(x, p=p, key=mask_key, training=True))

    # Reference: the same (1, batch, hidden) mask applied to every time step.
    n_feat = batch * hidden
    n_feat_p = n_feat + ((-n_feat) % 128)
    ref_mask = _dropout_mask(mask_key, n_feat, p, n_feat_p)[0, :n_feat].reshape(1, batch, hidden)
    expected = x * ref_mask
    assert bool(jnp.allclose(out, expected, rtol=1e-6, atol=1e-6)), \
        "output does not match locked-dropout reference"

    # Locked across time: identical drop pattern at every seq step.
    zero_pattern = (out == 0.0)
    assert bool(jnp.all(zero_pattern == zero_pattern[0:1])), "mask not locked across seq"

    # Kept activations rescaled by 1/(1-p).
    kept = ~zero_pattern
    scale = 1.0 / (1.0 - p)
    assert bool(jnp.allclose(jnp.where(kept, out, 0.0),
                             jnp.where(kept, x * scale, 0.0),
                             rtol=1e-6, atol=1e-6)), "kept activations not rescaled"

    # Eval mode and p == 0 are identity.
    out_eval = jax.block_until_ready(locked_dropout(x, p=p, key=mask_key, training=False))
    assert bool(jnp.array_equal(out_eval, x))
    out_p0 = jax.block_until_ready(locked_dropout(x, p=0.0, key=mask_key, training=True))
    assert bool(jnp.array_equal(out_p0, x))

    # --- secondary check: exercises the multi-step (pipelined, even) grid path ---
    s2, b2, h2 = 320, 8, 256   # 2.6 MiB f32 -> >= 4 even grid steps
    x2 = jax.random.normal(x2_key, (s2, b2, h2), dtype=jnp.float32)
    out2 = jax.block_until_ready(locked_dropout(x2, p=0.25, key=mask2_key, training=True))
    nf2 = b2 * h2
    nf2_p = nf2 + ((-nf2) % 128)
    ref_mask2 = _dropout_mask(mask2_key, nf2, 0.25, nf2_p)[0, :nf2].reshape(1, b2, h2)
    assert bool(jnp.allclose(out2, x2 * ref_mask2, rtol=1e-6, atol=1e-6)), \
        "tiled-grid output does not match reference"

    print("KERNEL_OK")
</pallas_src>

<mosaic_0001>
module attributes {stable_mosaic.version = 11 : i64} {
  func.func @_locked_dropout_kernel(%arg0: i32, %arg1: i32, %arg2: memref<8x128xf32, #tpu.memory_space<vmem>>, %arg3: memref<8x128xf32, #tpu.memory_space<vmem>>, %arg4: memref<8x128xf32, #tpu.memory_space<vmem>>) attributes {dimension_semantics = [#tpu.dimension_semantics<parallel>, #tpu.dimension_semantics<parallel>], iteration_bounds = array<i64: 1, 1>, scalar_prefetch = 0 : i64, scratch_operands = 0 : i64, tpu.core_type = #tpu.core_type<tc>, window_params = [{transform_indices = @transform_0, window_bounds = array<i64: 8, 128>}, {transform_indices = @transform_1, window_bounds = array<i64: 8, 128>}, {transform_indices = @transform_2, window_bounds = array<i64: 8, 128>}]} {
    %c0 = arith.constant 0 : index
    %c0_0 = arith.constant 0 : index
    %0 = vector.load %arg2[%c0, %c0_0] : memref<8x128xf32, #tpu.memory_space<vmem>>, vector<8x128xf32>
    %1 = vector.shape_cast %0 : vector<8x128xf32> to vector<1x8x128xf32>
    %c0_1 = arith.constant 0 : index
    %c0_2 = arith.constant 0 : index
    %2 = vector.load %arg3[%c0_1, %c0_2] : memref<8x128xf32, #tpu.memory_space<vmem>>, vector<8x128xf32>
    %3 = vector.shape_cast %2 : vector<8x128xf32> to vector<1x8x128xf32>
    %4 = arith.mulf %1, %3 : vector<1x8x128xf32>
    %5 = vector.shape_cast %4 : vector<1x8x128xf32> to vector<8x128xf32>
    %c0_3 = arith.constant 0 : index
    %c0_4 = arith.constant 0 : index
    %6 = vector.load %arg4[%c0_3, %c0_4] : memref<8x128xf32, #tpu.memory_space<vmem>>, vector<8x128xf32>
    tpu.vector_store %arg4[%c0_3, %c0_4], %5 {strides = array<i32>} : memref<8x128xf32, #tpu.memory_space<vmem>>, vector<8x128xf32>,
    return
  }
  func.func @transform_0(%arg0: i32, %arg1: i32) -> (i32, i32) {
    %c0_i32 = arith.constant 0 : i32
    return %arg1, %arg0 : i32, i32
  }
  func.func @transform_1(%arg0: i32, %arg1: i32) -> (i32, i32) {
    %c0_i32 = arith.constant 0 : i32
    %c0_i32_0 = arith.constant 0 : i32
    return %c0_i32, %arg0 : i32, i32
  }
  func.func @transform_2(%arg0: i32, %arg1: i32) -> (i32, i32) {
    %c0_i32 = arith.constant 0 : i32
    return %arg1, %arg0 : i32, i32
  }
}

</mosaic_0001>

<llo_original>
// kernel: tpu_custom_call.1
$region0: #{tpu_custom_call.1}
  #allocation0 [shape = 'u32[]', space=smem, size = 0x4, offset = 0x4, fixed_abs, tag = 'smem constant byte address 0x4 - core index']
  #allocation1 [shape = 'u32[144,128]{1,0:T(1,128)}', space=vmem, size = 0x12000, scoped, tag = 'internal scratch']
  %s0 = inlined_call_operand.hbm [shape: f32[8,128], index: 0, kind: input, shape index: {}]
  %s1 = inlined_call_operand.hbm [shape: f32[8,128], index: 1, kind: input, shape index: {}]
  %s2 = inlined_call_operand.hbm [shape: f32[8,128], index: 2, kind: output, shape index: {}]
  %s3 = sld [smem:[#allocation0]]
  $region26: #{tpu_custom_call.1} parent=0
    _
  %s5 = ssub.s32 1, %s3
  %s6 = scalar_select 0, %s5, %s3
  $region1: #{tpu_custom_call.1} parent=0
    #allocation2 [shape = 'u8[4096]{0}', space=vmem, size = 0x1000, scoped, tag = 'input window, operand 0, single buffered']
    #allocation3 [shape = 's32[1]{0}', space=sflag, size = 0x4, scoped, tag = 'scoped memory for tpu_custom_call.1']
    #allocation4 [shape = 's32[1]{0}', space=sflag, size = 0x4, scoped, tag = 'scoped memory for tpu_custom_call.1']
    #allocation5 [shape = 'u8[4096]{0}', space=vmem, size = 0x1000, scoped, tag = 'input window, operand 1, single buffered']
    #allocation6 [shape = 's32[1]{0}', space=sflag, size = 0x4, scoped, tag = 'scoped memory for tpu_custom_call.1']
    #allocation7 [shape = 'u8[4096]{0}', space=vmem, size = 0x1000, scoped, tag = 'output window, operand 0, single buffered']
    %7 = vsyncpa [#allocation3], 0
    %8 = vsyncpa [#allocation6], 0
    %9 = vsyncpa [#allocation4], 0
    // Predicated region
    $region2: #{tpu_custom_call.1} parent=1 // pred_check
      _
    $region3: #{tpu_custom_call.1} parent=1 // pred_check_branch
      %11 = sbr.rel (0) target = $region5
    $region4: #{tpu_custom_call.1} parent=1 // pred_region
      %s13 = ssub.s32 128, 128
      %14 = vsyncadd [#allocation3], %s13
      %s16 = sshll.u32 [#allocation2], 4
      %s17 = int_to_ptr.vmem [resolvable:$true] %s16
      %19 = dma.hbm_to_vmem [thread:$0]  %s0, 128, %s17, [#allocation3]
    $region5: #{tpu_custom_call.1} parent=1 // pred_fallthru
      _
    // Predicated region
    $region6: #{tpu_custom_call.1} parent=1 // pred_check
      _
    $region7: #{tpu_custom_call.1} parent=1 // pred_check_branch
      %21 = sbr.rel (0) target = $region9
    $region8: #{tpu_custom_call.1} parent=1 // pred_region
      %s23 = ssub.s32 128, 128
      %24 = vsyncadd [#allocation6], %s23
      %s26 = sshll.u32 [#allocation5], 4
      %s27 = int_to_ptr.vmem [resolvable:$true] %s26
      %29 = dma.hbm_to_vmem [thread:$0]  %s1, 128, %s27, [#allocation6]
    $region9: #{tpu_custom_call.1} parent=1 // pred_fallthru
      _
    // Predicated region
    $region10: #{tpu_custom_call.1} parent=1 // pred_check
      _
    $region11: #{tpu_custom_call.1} parent=1 // pred_check_branch
      %31 = sbr.rel (0) target = $region13
    $region12: #{tpu_custom_call.1} parent=1 // pred_region
      %32 = dma.done [#allocation3], 128
    $region13: #{tpu_custom_call.1} parent=1 // pred_fallthru
      _
    // Predicated region
    $region14: #{tpu_custom_call.1} parent=1 // pred_check
      _
    $region15: #{tpu_custom_call.1} parent=1 // pred_check_branch
      %34 = sbr.rel (0) target = $region17
    $region16: #{tpu_custom_call.1} parent=1 // pred_region
      %35 = dma.done [#allocation6], 128
    $region17: #{tpu_custom_call.1} parent=1 // pred_fallthru
      _
    %v36 = vld [vmem:[#allocation2] sm:$0xff]
    %v37 = vld [vmem:[#allocation5] sm:$0xff]
    %v38 = vmul.f32 %v36, %v37
    %39 = vst [vmem:[#allocation7] sm:$0xff] %v38
    // Predicated region
    $region18: #{tpu_custom_call.1} parent=1 // pred_check
      _
    $region19: #{tpu_custom_call.1} parent=1 // pred_check_branch
      %41 = sbr.rel (0) target = $region21
    $region20: #{tpu_custom_call.1} parent=1 // pred_region
      %s43 = ssub.s32 128, 128
      %44 = vsyncadd [#allocation4], %s43
      %s46 = sshll.u32 [#allocation7], 4
      %s47 = int_to_ptr.vmem [resolvable:$true] %s46
      %49 = dma.vmem_to_hbm [thread:$0]  %s47, 128, %s2, [#allocation4]
    $region21: #{tpu_custom_call.1} parent=1 // pred_fallthru
      _
    // Predicated region
    $region22: #{tpu_custom_call.1} parent=1 // pred_check
      _
    $region23: #{tpu_custom_call.1} parent=1 // pred_check_branch
      %51 = sbr.rel (0) target = $region25
    $region24: #{tpu_custom_call.1} parent=1 // pred_region
      %52 = dma.done [#allocation4], 128
    $region25: #{tpu_custom_call.1} parent=1 // pred_fallthru
      _
    %53 = vsyncpa [#allocation3], 1
    %54 = vsyncpa [#allocation6], 1
    %55 = vsyncpa [#allocation4], 1

</llo_original>
